<compile_context>
chip_gen: v6e
topology: v6e:2x2x1
jax: 0.10.0
libtpu: 0.0.40
codegen_flags: <defaults>
</compile_context>

<pallas_src>
import jax
import jax.numpy as jnp
import numpy as np
from jax.experimental import pallas as pl
from jax.experimental.pallas import tpu as pltpu

NEG_SLOPE = 0.01   # nn.LeakyReLU default
LN_EPS = 1e-5      # nn.LayerNorm default

# Row indices in the packed (8, D) per-feature-vector table.
_ROW_B0, _ROW_B1, _ROW_BO = 0, 1, 2


def _leaky_relu(h):
    return jnp.where(h >= 0.0, h, NEG_SLOPE * h)


def _layer_norm_no_affine(h):
    # Centered (torch-style) form; gamma/beta are folded into the next Linear.
    inv_d = 1.0 / h.shape[-1]
    mean = jnp.sum(h, axis=-1, keepdims=True) * inv_d
    c = h - mean
    var = jnp.sum(c * c, axis=-1, keepdims=True) * inv_d
    return c * jax.lax.rsqrt(var + LN_EPS)


def latent_mlp_kernel(x_ref, w0_ref, w1_ref, wo_ref, vec_ref, o_ref):
    # Packed per-feature vectors (f32): layer biases (LN affine already folded into W/b).
    vecs = vec_ref[...]
    b0 = vecs[_ROW_B0:_ROW_B0 + 1]
    b1 = vecs[_ROW_B1:_ROW_B1 + 1]
    bo = vecs[_ROW_BO:_ROW_BO + 1]

    x = x_ref[...]  # (block_b, F) bf16 — cast once at the HBM boundary in the wrapper.

    # layer 1: Linear (bf16 MXU, f32 acc) -> LeakyReLU -> LayerNorm (affine folded fwd)
    h = jnp.dot(x, w0_ref[...], preferred_element_type=jnp.float32) + b0
    h = _layer_norm_no_affine(_leaky_relu(h))

    # layer 2
    h = jnp.dot(h.astype(jnp.bfloat16), w1_ref[...],
                preferred_element_type=jnp.float32) + b1
    h = _layer_norm_no_affine(_leaky_relu(h))

    # output layer
    h = jnp.dot(h.astype(jnp.bfloat16), wo_ref[...],
                preferred_element_type=jnp.float32) + bo

    o_ref[...] = h.astype(o_ref.dtype)


def _vmem_limit_bytes():
    """Per-generation scoped-VMEM limit: ~3/4 of reported VMEM, capped at 100 MiB.
    Falls back to a v7x-safe 48 MiB if the hardware query is unavailable."""
    try:
        info = pltpu.get_tpu_info()
        cap = getattr(info, "vmem_capacity_bytes", None)
        if cap:
            return int(min(cap * 3 // 4, 100 * 1024 * 1024))
    except Exception:
        pass
    return 48 * 1024 * 1024


def _choose_block_b(B, F, D, vmem_limit, *, max_block=1024):
    """Pick a batch tile.

    Budget accounts for everything resident in VMEM: single-buffered bf16 weights,
    the packed (8, D) f32 vector tile, double-buffered bf16 x / f32 out tiles, and
    ~3x block_b*D*4 B of f32 intermediates.  The tile is capped at max_block, rounded
    to a multiple of 16 (bf16 sublane packing), and capped at ceil(B/2) so the grid
    has >= 2 'parallel' steps for v7x's two TensorCores (harmless on v5e/v6e)."""
    if B <= 16:
        return B
    resident = 2 * (F * D + 2 * D * D) + 8 * D * 4          # bf16 weights + vec tile
    per_row = 2 * F * 2 + 2 * D * 4 + 3 * D * 4              # 2x bf16 x, 2x f32 out, f32 h
    budget = vmem_limit // 2                                  # headroom for compiler scratch
    avail = max(budget - resident, per_row * 16)
    vmem_blk = avail // per_row
    two_step_blk = pl.cdiv(B, 2)                              # >= 2 grid steps (megacore)
    blk = min(vmem_blk, two_step_blk, max_block, B)
    blk = max(16, (blk // 16) * 16)
    return int(min(blk, B))


def latent_mlp_forward(x, params, *, block_b=None):
    """Runs the fused LatentMLP forward pass on TPU via Pallas.

    x:      (B, in_features) float32 (cast to bf16 at the HBM boundary)
    params: dict of f32 weights (see init_params)
    """
    B, F = x.shape
    D = params["w0"].shape[1]
    vmem_limit = _vmem_limit_bytes()
    if block_b is None:
        block_b = _choose_block_b(B, F, D, vmem_limit)

    grid = (pl.cdiv(B, block_b),)

    # Fold LayerNorm affine params into the following Linear (all in f32):
    #   ln(h) @ W + b = norm(h) @ (gamma[:,None] * W) + (beta @ W + b)
    w1_eff = params["w1"] * params["g0"].reshape(D, 1)
    b1_eff = params["be0"] @ params["w1"] + params["b1"]
    wo_eff = params["wo"] * params["g1"].reshape(D, 1)
    bo_eff = params["be1"] @ params["wo"] + params["bo"]

    # bf16 weights / activations for the MXU; f32 accumulation + f32 biases.
    x_bf16 = x.astype(jnp.bfloat16)
    w0 = params["w0"].astype(jnp.bfloat16)
    w1 = w1_eff.astype(jnp.bfloat16)
    wo = wo_eff.astype(jnp.bfloat16)

    # Pack the three (1, D) bias vectors into a single (8, D) f32 tile (one DMA).
    vec = jnp.concatenate(
        [params["b0"], b1_eff, bo_eff, jnp.zeros((5, D), jnp.float32)], axis=0)

    resident = pl.Buffered(1)   # weights are grid-invariant: single-buffered residents
    in_specs = [
        pl.BlockSpec((block_b, F), lambda i: (i, 0)),                          # x (tiled)
        pl.BlockSpec((F, D), lambda i: (0, 0), pipeline_mode=resident),        # w0
        pl.BlockSpec((D, D), lambda i: (0, 0), pipeline_mode=resident),        # w1
        pl.BlockSpec((D, D), lambda i: (0, 0), pipeline_mode=resident),        # wo
        pl.BlockSpec((8, D), lambda i: (0, 0), pipeline_mode=resident),        # biases
    ]
    out_spec = pl.BlockSpec((block_b, D), lambda i: (i, 0))

    fn = pl.pallas_call(
        latent_mlp_kernel,
        out_shape=jax.ShapeDtypeStruct((B, D), jnp.float32),
        grid_spec=pltpu.PrefetchScalarGridSpec(
            num_scalar_prefetch=0,
            grid=grid,
            in_specs=in_specs,
            out_specs=out_spec,
        ),
        compiler_params=pltpu.CompilerParams(
            dimension_semantics=("parallel",),   # batch sharding across v7x's 2 TCs
            vmem_limit_bytes=vmem_limit,
        ),
    )
    return fn(x_bf16, w0, w1, wo, vec)


def latent_mlp_reference(x, params):
    """Pure-f32 JAX reference matching the PyTorch module exactly
    (Linear -> LeakyReLU -> LayerNorm) x2 -> Linear."""
    def lrelu(h):
        return jnp.where(h >= 0.0, h, NEG_SLOPE * h)

    def ln(h, g, b):
        m = jnp.mean(h, axis=-1, keepdims=True)
        v = jnp.mean(jnp.square(h - m), axis=-1, keepdims=True)
        return (h - m) * jax.lax.rsqrt(v + LN_EPS) * g + b

    h = ln(lrelu(x @ params["w0"] + params["b0"]), params["g0"], params["be0"])
    h = ln(lrelu(h @ params["w1"] + params["b1"]), params["g1"], params["be1"])
    return h @ params["wo"] + params["bo"]


def init_params(key, in_features, latent_dimension):
    """Deterministic init. Shapes follow the PyTorch module:
       Linear(in_features, D), Linear(D, D), Linear(D, D) (output layer), LayerNorm(D) x2.
       LayerNorm gamma/beta are given non-trivial ("trained") values so the
       gamma/beta -> Linear folding path in the wrapper is actually exercised."""
    D = latent_dimension
    k = jax.random.split(key, 10)

    def kaiming_uniform(k_, fan_in, shape):
        bound = 1.0 / np.sqrt(fan_in)
        return jax.random.uniform(k_, shape, jnp.float32, -bound, bound)

    params = {
        "w0": kaiming_uniform(k[0], in_features, (in_features, D)),
        "b0": kaiming_uniform(k[1], in_features, (1, D)),
        "g0": 1.0 + 0.1 * jax.random.uniform(k[6], (1, D), jnp.float32, -1.0, 1.0),
        "be0": 0.1 * jax.random.normal(k[7], (1, D), jnp.float32),
        "w1": kaiming_uniform(k[2], D, (D, D)),
        "b1": kaiming_uniform(k[3], D, (1, D)),
        "g1": 1.0 + 0.1 * jax.random.uniform(k[8], (1, D), jnp.float32, -1.0, 1.0),
        "be1": 0.1 * jax.random.normal(k[9], (1, D), jnp.float32),
        "wo": kaiming_uniform(k[4], D, (D, D)),
        "bo": kaiming_uniform(k[5], D, (1, D)),
    }
    return params


if __name__ == "__main__":
    key = jax.random.PRNGKey(0)
    kx, kp = jax.random.split(key)

    # Lane-dense latent dim (128) and a batch big enough that the derived tile gives a
    # 2-step 'parallel' grid (block_b=128) — both v7x TensorCores get a block.
    B = 256
    IN_FEATURES = 64
    LATENT = 128

    x = jax.random.normal(kx, (B, IN_FEATURES), jnp.float32)
    params = init_params(kp, IN_FEATURES, LATENT)

    out = latent_mlp_forward(x, params)
    out = jax.block_until_ready(out)

    # Kernel uses bf16 MXU operands with f32 accumulation; compare against the exact
    # f32 reference with a bf16-appropriate tolerance.
    ref = latent_mlp_reference(x, params)
    np.testing.assert_allclose(np.asarray(out), np.asarray(ref), rtol=3e-2, atol=3e-2)

    print("KERNEL_OK")
</pallas_src>

<mosaic_0001>
module attributes {stable_mosaic.version = 11 : i64} {
  func.func @latent_mlp_kernel(%arg0: i32, %arg1: memref<128x64xbf16, #tpu.memory_space<vmem>>, %arg2: memref<64x128xbf16, #tpu.memory_space<vmem>>, %arg3: memref<128x128xbf16, #tpu.memory_space<vmem>>, %arg4: memref<128x128xbf16, #tpu.memory_space<vmem>>, %arg5: memref<8x128xf32, #tpu.memory_space<vmem>>, %arg6: memref<128x128xf32, #tpu.memory_space<vmem>>) attributes {dimension_semantics = [#tpu.dimension_semantics<parallel>], iteration_bounds = array<i64: 2>, scalar_prefetch = 0 : i64, scratch_operands = 0 : i64, tpu.core_type = #tpu.core_type<tc>, window_params = [{transform_indices = @transform_0, window_bounds = array<i64: 128, 64>}, {pipeline_mode = #tpu.pipeline_mode<synchronous>, transform_indices = @transform_1, window_bounds = array<i64: 64, 128>}, {pipeline_mode = #tpu.pipeline_mode<synchronous>, transform_indices = @transform_2, window_bounds = array<i64: 128, 128>}, {pipeline_mode = #tpu.pipeline_mode<synchronous>, transform_indices = @transform_3, window_bounds = array<i64: 128, 128>}, {pipeline_mode = #tpu.pipeline_mode<synchronous>, transform_indices = @transform_4, window_bounds = array<i64: 8, 128>}, {transform_indices = @transform_5, window_bounds = array<i64: 128, 128>}]} {
    %c0 = arith.constant 0 : index
    %c0_0 = arith.constant 0 : index
    %0 = vector.load %arg5[%c0, %c0_0] : memref<8x128xf32, #tpu.memory_space<vmem>>, vector<8x128xf32>
    %1 = vector.extract_strided_slice %0 {offsets = [0, 0], sizes = [1, 128], strides = [1, 1]} : vector<8x128xf32> to vector<1x128xf32>
    %2 = vector.extract_strided_slice %0 {offsets = [1, 0], sizes = [1, 128], strides = [1, 1]} : vector<8x128xf32> to vector<1x128xf32>
    %3 = vector.extract_strided_slice %0 {offsets = [2, 0], sizes = [1, 128], strides = [1, 1]} : vector<8x128xf32> to vector<1x128xf32>
    %c0_1 = arith.constant 0 : index
    %c0_2 = arith.constant 0 : index
    %4 = vector.load %arg1[%c0_1, %c0_2] : memref<128x64xbf16, #tpu.memory_space<vmem>>, vector<128x64xbf16>
    %c0_3 = arith.constant 0 : index
    %c0_4 = arith.constant 0 : index
    %5 = vector.load %arg2[%c0_3, %c0_4] : memref<64x128xbf16, #tpu.memory_space<vmem>>, vector<64x128xbf16>
    %cst = arith.constant dense<0.000000e+00> : vector<128x128xf32>
    %6 = tpu.matmul %4, %5, %cst {dimension_numbers = #tpu.dot_dimension_numbers<[1], [0], [0], [1], [0, 0, 1, 1], [], []>} : vector<128x64xbf16>, vector<64x128xbf16>, vector<128x128xf32> -> vector<128x128xf32>
    %7 = vector.broadcast %1 : vector<1x128xf32> to vector<128x128xf32>
    %8 = arith.addf %6, %7 : vector<128x128xf32>
    %cst_5 = arith.constant 0.000000e+00 : f32
    %9 = vector.broadcast %cst_5 : f32 to vector<128x128xf32>
    %10 = arith.cmpf oge, %8, %9 : vector<128x128xf32>
    %cst_6 = arith.constant 0.00999999977 : f32
    %11 = vector.broadcast %cst_6 : f32 to vector<128x128xf32>
    %12 = arith.mulf %11, %8 : vector<128x128xf32>
    %13 = arith.select %10, %8, %12 : vector<128x128xi1>, vector<128x128xf32>
    %cst_7 = arith.constant dense<0.000000e+00> : vector<128xf32>
    %14 = vector.multi_reduction <add>, %13, %cst_7 [1] : vector<128x128xf32> to vector<128xf32>
    %15 = vector.shape_cast %14 : vector<128xf32> to vector<128x1xf32>
    %cst_8 = arith.constant 7.812500e-03 : f32
    %16 = vector.broadcast %cst_8 : f32 to vector<128x1xf32>
    %17 = arith.mulf %15, %16 : vector<128x1xf32>
    %18 = vector.broadcast %17 : vector<128x1xf32> to vector<128x128xf32>
    %19 = arith.subf %13, %18 : vector<128x128xf32>
    %20 = arith.mulf %19, %19 : vector<128x128xf32>
    %cst_9 = arith.constant dense<0.000000e+00> : vector<128xf32>
    %21 = vector.multi_reduction <add>, %20, %cst_9 [1] : vector<128x128xf32> to vector<128xf32>
    %22 = vector.shape_cast %21 : vector<128xf32> to vector<128x1xf32>
    %cst_10 = arith.constant 7.812500e-03 : f32
    %23 = vector.broadcast %cst_10 : f32 to vector<128x1xf32>
    %24 = arith.mulf %22, %23 : vector<128x1xf32>
    %cst_11 = arith.constant 9.99999974E-6 : f32
    %25 = vector.broadcast %cst_11 : f32 to vector<128x1xf32>
    %26 = arith.addf %24, %25 : vector<128x1xf32>
    %27 = math.rsqrt %26 : vector<128x1xf32>
    %28 = vector.broadcast %27 : vector<128x1xf32> to vector<128x128xf32>
    %29 = arith.mulf %19, %28 : vector<128x128xf32>
    %30 = arith.truncf %29 : vector<128x128xf32> to vector<128x128xbf16>
    %c0_12 = arith.constant 0 : index
    %c0_13 = arith.constant 0 : index
    %31 = vector.load %arg3[%c0_12, %c0_13] : memref<128x128xbf16, #tpu.memory_space<vmem>>, vector<128x128xbf16>
    %cst_14 = arith.constant dense<0.000000e+00> : vector<128x128xf32>
    %32 = tpu.matmul %30, %31, %cst_14 {dimension_numbers = #tpu.dot_dimension_numbers<[1], [0], [0], [1], [0, 0, 1, 1], [], []>} : vector<128x128xbf16>, vector<128x128xbf16>, vector<128x128xf32> -> vector<128x128xf32>
    %33 = vector.broadcast %2 : vector<1x128xf32> to vector<128x128xf32>
    %34 = arith.addf %32, %33 : vector<128x128xf32>
    %cst_15 = arith.constant 0.000000e+00 : f32
    %35 = vector.broadcast %cst_15 : f32 to vector<128x128xf32>
    %36 = arith.cmpf oge, %34, %35 : vector<128x128xf32>
    %cst_16 = arith.constant 0.00999999977 : f32
    %37 = vector.broadcast %cst_16 : f32 to vector<128x128xf32>
    %38 = arith.mulf %37, %34 : vector<128x128xf32>
    %39 = arith.select %36, %34, %38 : vector<128x128xi1>, vector<128x128xf32>
    %cst_17 = arith.constant dense<0.000000e+00> : vector<128xf32>
    %40 = vector.multi_reduction <add>, %39, %cst_17 [1] : vector<128x128xf32> to vector<128xf32>
    %41 = vector.shape_cast %40 : vector<128xf32> to vector<128x1xf32>
    %cst_18 = arith.constant 7.812500e-03 : f32
    %42 = vector.broadcast %cst_18 : f32 to vector<128x1xf32>
    %43 = arith.mulf %41, %42 : vector<128x1xf32>
    %44 = vector.broadcast %43 : vector<128x1xf32> to vector<128x128xf32>
    %45 = arith.subf %39, %44 : vector<128x128xf32>
    %46 = arith.mulf %45, %45 : vector<128x128xf32>
    %cst_19 = arith.constant dense<0.000000e+00> : vector<128xf32>
    %47 = vector.multi_reduction <add>, %46, %cst_19 [1] : vector<128x128xf32> to vector<128xf32>
    %48 = vector.shape_cast %47 : vector<128xf32> to vector<128x1xf32>
    %cst_20 = arith.constant 7.812500e-03 : f32
    %49 = vector.broadcast %cst_20 : f32 to vector<128x1xf32>
    %50 = arith.mulf %48, %49 : vector<128x1xf32>
    %cst_21 = arith.constant 9.99999974E-6 : f32
    %51 = vector.broadcast %cst_21 : f32 to vector<128x1xf32>
    %52 = arith.addf %50, %51 : vector<128x1xf32>
    %53 = math.rsqrt %52 : vector<128x1xf32>
    %54 = vector.broadcast %53 : vector<128x1xf32> to vector<128x128xf32>
    %55 = arith.mulf %45, %54 : vector<128x128xf32>
    %56 = arith.truncf %55 : vector<128x128xf32> to vector<128x128xbf16>
    %c0_22 = arith.constant 0 : index
    %c0_23 = arith.constant 0 : index
    %57 = vector.load %arg4[%c0_22, %c0_23] : memref<128x128xbf16, #tpu.memory_space<vmem>>, vector<128x128xbf16>
    %cst_24 = arith.constant dense<0.000000e+00> : vector<128x128xf32>
    %58 = tpu.matmul %56, %57, %cst_24 {dimension_numbers = #tpu.dot_dimension_numbers<[1], [0], [0], [1], [0, 0, 1, 1], [], []>} : vector<128x128xbf16>, vector<128x128xbf16>, vector<128x128xf32> -> vector<128x128xf32>
    %59 = vector.broadcast %3 : vector<1x128xf32> to vector<128x128xf32>
    %60 = arith.addf %58, %59 : vector<128x128xf32>
    %c0_25 = arith.constant 0 : index
    %c0_26 = arith.constant 0 : index
    %61 = vector.load %arg6[%c0_25, %c0_26] : memref<128x128xf32, #tpu.memory_space<vmem>>, vector<128x128xf32>
    tpu.vector_store %arg6[%c0_25, %c0_26], %60 {strides = array<i32>} : memref<128x128xf32, #tpu.memory_space<vmem>>, vector<128x128xf32>,
    return
  }
  func.func @transform_0(%arg0: i32) -> (i32, i32) {
    %c0_i32 = arith.constant 0 : i32
    %c0_i32_0 = arith.constant 0 : i32
    return %arg0, %c0_i32 : i32, i32
  }
  func.func @transform_1(%arg0: i32) -> (i32, i32) {
    %c0_i32 = arith.constant 0 : i32
    %c0_i32_0 = arith.constant 0 : i32
    %c0_i32_1 = arith.constant 0 : i32
    return %c0_i32, %c0_i32_0 : i32, i32
  }
  func.func @transform_2(%arg0: i32) -> (i32, i32) {
    %c0_i32 = arith.constant 0 : i32
    %c0_i32_0 = arith.constant 0 : i32
    %c0_i32_1 = arith.constant 0 : i32
    return %c0_i32, %c0_i32_0 : i32, i32
  }
  func.func @transform_3(%arg0: i32) -> (i32, i32) {
    %c0_i32 = arith.constant 0 : i32
    %c0_i32_0 = arith.constant 0 : i32
    %c0_i32_1 = arith.constant 0 : i32
    return %c0_i32, %c0_i32_0 : i32, i32
  }
  func.func @transform_4(%arg0: i32) -> (i32, i32) {
    %c0_i32 = arith.constant 0 : i32
    %c0_i32_0 = arith.constant 0 : i32
    %c0_i32_1 = arith.constant 0 : i32
    return %c0_i32, %c0_i32_0 : i32, i32
  }
  func.func @transform_5(%arg0: i32) -> (i32, i32) {
    %c0_i32 = arith.constant 0 : i32
    %c0_i32_0 = arith.constant 0 : i32
    return %arg0, %c0_i32 : i32, i32
  }
}

</mosaic_0001>

<llo_original>
// kernel: tpu_custom_call.1
$region0: #{tpu_custom_call.1}
  #allocation0 [shape = 'u32[]', space=smem, size = 0x4, offset = 0x4, fixed_abs, tag = 'smem constant byte address 0x4 - core index']
  #allocation1 [shape = 'u32[144,128]{1,0:T(1,128)}', space=vmem, size = 0x12000, scoped, tag = 'internal scratch']
  %s0 = inlined_call_operand.vmem [shape: bf16[256,64], index: 0, kind: input, shape index: {}]
  %s1 = inlined_call_operand.vmem [shape: bf16[64,128], index: 1, kind: input, shape index: {}]
  %s2 = inlined_call_operand.vmem [shape: bf16[128,128], index: 2, kind: input, shape index: {}]
  %s3 = inlined_call_operand.vmem [shape: bf16[128,128], index: 3, kind: input, shape index: {}]
  %s4 = inlined_call_operand.vmem [shape: f32[8,128], index: 4, kind: input, shape index: {}]
  %s5 = inlined_call_operand.hbm [shape: f32[256,128], index: 5, kind: output, shape index: {}]
  %s6 = sld [smem:[#allocation0]]
  $region53: #{tpu_custom_call.1} parent=0
    _
  %s8 = ssub.s32 1, %s6
  %s9 = scalar_select 0, %s8, %s6
  $region1: #{tpu_custom_call.1} parent=0
    #allocation2 [shape = 'u8[131072]{0}', space=vmem, size = 0x20000, scoped, tag = 'output window, operand 0']
    #allocation3 [shape = 's32[2]{0}', space=sflag, size = 0x8, scoped, tag = 'scoped memory for tpu_custom_call.1']
    %10 = vsyncpa [#allocation3], 0
    %s11 = scalar_lea.sflag [#allocation3], 1
    %12 = vsyncpa %s11, 0
    loop: start=0, step=1, limit=4
    $region2: #{tpu_custom_call.1} parent=1 // loop_pre_header
      _
    $region3: #{tpu_custom_call.1} parent=1 // loop_header
      %s14 = sphi 0, %s18
      %p15 = scmp.ge.s32.totalorder %s14, 4
      %s24 = sphi 0, %s26
      %s27 = sphi 0, %s24
      %s28 = sphi 0, %s27
      %s44 = sphi 0, %s28
      %s48 = sphi 0, %s48
      %s50 = sphi 0, %s48
      %s51 = sphi 0, %s50
      %s65 = sphi 0, %s51
      %s69 = sphi 0, %s69
      %s71 = sphi 0, %s69
      %s72 = sphi 0, %s71
      %s86 = sphi 0, %s72
      %s90 = sphi 0, %s90
      %s92 = sphi 0, %s90
      %s93 = sphi 0, %s92
      %s107 = sphi 0, %s93
      %s111 = sphi 0, %s111
      %s113 = sphi 0, %s111
      %s114 = sphi 0, %s113
      %s128 = sphi 0, %s114
      %s134 = sphi 0, %s136
      %s137 = sphi 0, %s134
      %s138 = sphi 0, %s137
      %s154 = sphi 0, %s138
    $region4: #{tpu_custom_call.1} parent=1 // loop_header_branch
      %17 = sbr.rel (%p15) target = $region8
    $region5: #{tpu_custom_call.1} parent=1 // loop_body
      %s19 = ssub.s32 %s14, 1
      %s20 = ssub.s32 %s14, 2
      %s21 = sadd.s32 %s14, 1
      %s22 = ssub.s32 %s14, %s21
      %p23 = scmp.eq.s32.totalorder %s22, 0
      %s25 = sadd.s32 %s24, 1
      %s26 = scalar_select %p23, %s24, %s25
      %p29 = pneg %p23
      %p30 = scmp.eq.s32.totalorder %s14, 1
      %p31 = por %p29, %p30
      %p32 = scmp.ne.s32.totalorder %s24, %s27
      %p33 = scmp.eq.s32.totalorder %s14, 0
      %p34 = por %p32, %p33
      %p35 = scmp.ne.s32.totalorder %s24, %s27
      %p36 = scmp.eq.s32.totalorder %s19, 1
      %p37 = por %p35, %p36
      %p38 = scmp.ne.s32.totalorder %s27, %s28
      %p39 = scmp.eq.s32.totalorder %s19, 0
      %p40 = por %p38, %p39
      %p41 = scmp.ne.s32.totalorder %s27, %s28
      %p42 = scmp.eq.s32.totalorder %s20, 1
      %p43 = por %p41, %p42
      %p45 = scmp.ne.s32.totalorder %s28, %s44
      %p46 = scmp.eq.s32.totalorder %s20, 0
      %p47 = por %p45, %p46
      %s49 = sadd.s32 %s48, 1
      %p52 = scmp.eq.s32.totalorder %s14, 1
      %p53 = scmp.ne.s32.totalorder %s48, %s50
      %p54 = scmp.eq.s32.totalorder %s14, 0
      %p55 = por %p53, %p54
      %p56 = scmp.ne.s32.totalorder %s48, %s50
      %p57 = scmp.eq.s32.totalorder %s19, 1
      %p58 = por %p56, %p57
      %p59 = scmp.ne.s32.totalorder %s50, %s51
      %p60 = scmp.eq.s32.totalorder %s19, 0
      %p61 = por %p59, %p60
      %p62 = scmp.ne.s32.totalorder %s50, %s51
      %p63 = scmp.eq.s32.totalorder %s20, 1
      %p64 = por %p62, %p63
      %p66 = scmp.ne.s32.totalorder %s51, %s65
      %p67 = scmp.eq.s32.totalorder %s20, 0
      %p68 = por %p66, %p67
      %s70 = sadd.s32 %s69, 1
      %p73 = scmp.eq.s32.totalorder %s14, 1
      %p74 = scmp.ne.s32.totalorder %s69, %s71
      %p75 = scmp.eq.s32.totalorder %s14, 0
      %p76 = por %p74, %p75
      %p77 = scmp.ne.s32.totalorder %s69, %s71
      %p78 = scmp.eq.s32.totalorder %s19, 1
      %p79 = por %p77, %p78
      %p80 = scmp.ne.s32.totalorder %s71, %s72
      %p81 = scmp.eq.s32.totalorder %s19, 0
      %p82 = por %p80, %p81
      %p83 = scmp.ne.s32.totalorder %s71, %s72
      %p84 = scmp.eq.s32.totalorder %s20, 1
      %p85 = por %p83, %p84
      %p87 = scmp.ne.s32.totalorder %s72, %s86
      %p88 = scmp.eq.s32.totalorder %s20, 0
      %p89 = por %p87, %p88
      %s91 = sadd.s32 %s90, 1
      %p94 = scmp.eq.s32.totalorder %s14, 1
      %p95 = scmp.ne.s32.totalorder %s90, %s92
      %p96 = scmp.eq.s32.totalorder %s14, 0
      %p97 = por %p95, %p96
      %p98 = scmp.ne.s32.totalorder %s90, %s92
      %p99 = scmp.eq.s32.totalorder %s19, 1
      %p100 = por %p98, %p99
      %p101 = scmp.ne.s32.totalorder %s92, %s93
      %p102 = scmp.eq.s32.totalorder %s19, 0
      %p103 = por %p101, %p102
      %p104 = scmp.ne.s32.totalorder %s92, %s93
      %p105 = scmp.eq.s32.totalorder %s20, 1
      %p106 = por %p104, %p105
      %p108 = scmp.ne.s32.totalorder %s93, %s107
      %p109 = scmp.eq.s32.totalorder %s20, 0
      %p110 = por %p108, %p109
      %s112 = sadd.s32 %s111, 1
      %p115 = scmp.eq.s32.totalorder %s14, 1
      %p116 = scmp.ne.s32.totalorder %s111, %s113
      %p117 = scmp.eq.s32.totalorder %s14, 0
      %p118 = por %p116, %p117
      %p119 = scmp.ne.s32.totalorder %s111, %s113
      %p120 = scmp.eq.s32.totalorder %s19, 1
      %p121 = por %p119, %p120
      %p122 = scmp.ne.s32.totalorder %s113, %s114
      %p123 = scmp.eq.s32.totalorder %s19, 0
      %p124 = por %p122, %p123
      %p125 = scmp.ne.s32.totalorder %s113, %s114
      %p126 = scmp.eq.s32.totalorder %s20, 1
      %p127 = por %p125, %p126
      %p129 = scmp.ne.s32.totalorder %s114, %s128
      %p130 = scmp.eq.s32.totalorder %s20, 0
      %p131 = por %p129, %p130
      %s132 = ssub.s32 %s14, %s21
      %p133 = scmp.eq.s32.totalorder %s132, 0
      %s135 = sadd.s32 %s134, 1
      %s136 = scalar_select %p133, %s134, %s135
      %p139 = pneg %p133
      %p140 = scmp.eq.s32.totalorder %s14, 1
      %p141 = por %p139, %p140
      %p142 = scmp.ne.s32.totalorder %s134, %s137
      %p143 = scmp.eq.s32.totalorder %s14, 0
      %p144 = por %p142, %p143
      %p145 = scmp.ne.s32.totalorder %s134, %s137
      %p146 = scmp.eq.s32.totalorder %s19, 1
      %p147 = por %p145, %p146
      %p148 = scmp.ne.s32.totalorder %s137, %s138
      %p149 = scmp.eq.s32.totalorder %s19, 0
      %p150 = por %p148, %p149
      %p151 = scmp.ne.s32.totalorder %s137, %s138
      %p152 = scmp.eq.s32.totalorder %s20, 1
      %p153 = por %p151, %p152
      %p155 = scmp.ne.s32.totalorder %s138, %s154
      %p156 = scmp.eq.s32.totalorder %s20, 0
      %p157 = por %p155, %p156
      %p158 = scmp.le.s32.totalorder 1, %s14
      %p159 = scmp.lt.s32.totalorder %s14, 3
      %p160 = pnand %p158, %p159
      %p161 = pneg %p160
      // Predicated region
      $region9: #{tpu_custom_call.1} parent=5 // pred_check
        _
      $region10: #{tpu_custom_call.1} parent=5 // pred_check_branch
        %163 = sbr.rel (%p160) target = $region12
      $region11: #{tpu_custom_call.1} parent=5 // pred_region
        %s164 = ssub.s32 %s14, 1
        // Predicated region
        $region13: #{tpu_custom_call.1} parent=11 // pred_check
          %p165 = pneg %p61
        $region14: #{tpu_custom_call.1} parent=11 // pred_check_branch
          %167 = sbr.rel (%p165) target = $region16
        $region15: #{tpu_custom_call.1} parent=11 // pred_region
          _
        $region16: #{tpu_custom_call.1} parent=11 // pred_fallthru
          _
        // Predicated region
        $region17: #{tpu_custom_call.1} parent=11 // pred_check
          %p168 = pneg %p82
        $region18: #{tpu_custom_call.1} parent=11 // pred_check_branch
          %170 = sbr.rel (%p168) target = $region20
        $region19: #{tpu_custom_call.1} parent=11 // pred_region
          _
        $region20: #{tpu_custom_call.1} parent=11 // pred_fallthru
          _
        // Predicated region
        $region21: #{tpu_custom_call.1} parent=11 // pred_check
          %p171 = pneg %p103
        $region22: #{tpu_custom_call.1} parent=11 // pred_check_branch
          %173 = sbr.rel (%p171) target = $region24
        $region23: #{tpu_custom_call.1} parent=11 // pred_region
          _
        $region24: #{tpu_custom_call.1} parent=11 // pred_fallthru
          _
        // Predicated region
        $region25: #{tpu_custom_call.1} parent=11 // pred_check
          %p174 = pneg %p124
        $region26: #{tpu_custom_call.1} parent=11 // pred_check_branch
          %176 = sbr.rel (%p174) target = $region28
        $region27: #{tpu_custom_call.1} parent=11 // pred_region
          _
        $region28: #{tpu_custom_call.1} parent=11 // pred_fallthru
          _
      $region12: #{tpu_custom_call.1} parent=5 // pred_fallthru
        _
      %p177 = scmp.lt.s32.totalorder %s14, 2
      // Predicated region
      $region29: #{tpu_custom_call.1} parent=5 // pred_check
        %p178 = pneg %p177
      $region30: #{tpu_custom_call.1} parent=5 // pred_check_branch
        %180 = sbr.rel (%p178) target = $region32
      $region31: #{tpu_custom_call.1} parent=5 // pred_region
        // Predicated region
        $region33: #{tpu_custom_call.1} parent=31 // pred_check
          %p181 = pneg %p34
        $region34: #{tpu_custom_call.1} parent=31 // pred_check_branch
          %183 = sbr.rel (%p181) target = $region36
        $region35: #{tpu_custom_call.1} parent=31 // pred_region
          %s184 = smul.u32 16, %s14
          %p185 = scmp.lt.s32.totalorder %s184, 31
          %s186 = scalar_select %p185, %s184, 31
          %s187 = smul.addr %s186, 4
          %s188 = scalar_lea.vmem %s0, %s187
          %s189 = smul.u32 16, %s14
        $region36: #{tpu_custom_call.1} parent=31 // pred_fallthru
          _
      $region32: #{tpu_custom_call.1} parent=5 // pred_fallthru
        _
      %p190 = scmp.le.s32.totalorder 1, %s14
      %p191 = scmp.lt.s32.totalorder %s14, 3
      %p192 = pnand %p190, %p191
      %p193 = pneg %p192
      // Predicated region
      $region37: #{tpu_custom_call.1} parent=5 // pred_check
        _
      $region38: #{tpu_custom_call.1} parent=5 // pred_check_branch
        %195 = sbr.rel (%p192) target = $region40
      $region39: #{tpu_custom_call.1} parent=5 // pred_region
        %s196 = ssub.s32 %s14, 1
        %s197 = smul.u32 16, %s19
        %p198 = scmp.lt.s32.totalorder %s197, 31
        %s199 = scalar_select %p198, %s197, 31
        %s200 = smul.addr %s199, 4
        %s201 = scalar_lea.vmem %s0, %s200
        %p202 = pneg %p40
        %p203 = pneg %p37
        %p204 = pneg %p61
        %p205 = pneg %p58
        %p206 = pneg %p82
        %p207 = pneg %p79
        %p208 = pneg %p103
        %p209 = pneg %p100
        %p210 = pneg %p124
        %p211 = pneg %p121
        %p212 = pneg %p150
        %p213 = pneg %p147
        %s214 = sand.u32 %s137, 1
        %s215 = scalar_lea.sflag [#allocation3], %s214
        %s216 = sand.u32 %s137, 1
        %s217 = smul.addr %s216, 128
        %s218 = scalar_lea.vmem [#allocation2], %s217
        %s219 = smul.u32 16, %s19
        %p220 = scmp.lt.s32.totalorder %s219, 31
        %s221 = scalar_select %p220, %s219, 31
        %s222 = smul.addr %s221, 4
        %s223 = scalar_lea.vmem %s0, %s222
        %s224 = smul.u32 16, %s19
        %s225 = smul.u32 16, %s19
        %v227 = vld [vmem:[%s4] sm:$0xff]
        %v228 = vld [vmem:[%s223] sm:$0xf]
        %v229 = vld [vmem:[%s223 + $0x4] sm:$0xf]
        %v230 = vld [vmem:[%s223 + $0x8] sm:$0xf]
        %v231 = vld [vmem:[%s223 + $0xc] sm:$0xf]
        %v232 = vld [vmem:[%s223 + $0x10] sm:$0xf]
        %v233 = vld [vmem:[%s223 + $0x14] sm:$0xf]
        %v234 = vld [vmem:[%s223 + $0x18] sm:$0xf]
        %v235 = vld [vmem:[%s223 + $0x1c] sm:$0xf]
        %v236 = vld [vmem:[%s223 + $0x20] sm:$0xf]
        %v237 = vld [vmem:[%s223 + $0x24] sm:$0xf]
        %v238 = vld [vmem:[%s223 + $0x28] sm:$0xf]
        %v239 = vld [vmem:[%s223 + $0x2c] sm:$0xf]
        %v240 = vld [vmem:[%s223 + $0x30] sm:$0xf]
        %v241 = vld [vmem:[%s223 + $0x34] sm:$0xf]
        %v242 = vld [vmem:[%s223 + $0x38] sm:$0xf]
        %v243 = vld [vmem:[%s223 + $0x3c] sm:$0xf]
        %v244 = vld [vmem:[%s1] sm:$0xf]
        %v245 = vld [vmem:[%s1 + $0x4] sm:$0xf]
        %v246 = vld [vmem:[%s1 + $0x8] sm:$0xf]
        %v247 = vld [vmem:[%s1 + $0xc] sm:$0xf]
        %v248 = vld [vmem:[%s1 + $0x10] sm:$0xf]
        %v249 = vld [vmem:[%s1 + $0x14] sm:$0xf]
        %v250 = vld [vmem:[%s1 + $0x18] sm:$0xf]
        %v251 = vld [vmem:[%s1 + $0x1c] sm:$0xf]
        %v252 = vlaneseq
        %v253 = vshrl.u32 %v252, 7
        %v254 = vsub.s32 0, %v253
        %v255 = vrot.slane %v227, %v254
        %v272 = vunpack.c.l.b16 %v228
        %v273 = vunpack.c.l.b16 %v229
        %v274 = vunpack.c.l.b16 %v230
        %v275 = vunpack.c.l.b16 %v231
        %v276 = vunpack.c.l.b16 %v232
        %v277 = vunpack.c.l.b16 %v233
        %v278 = vunpack.c.l.b16 %v234
        %v279 = vunpack.c.l.b16 %v235
        %v280 = vunpack.c.l.b16 %v236
        %v281 = vunpack.c.l.b16 %v237
        %v282 = vunpack.c.l.b16 %v238
        %v283 = vunpack.c.l.b16 %v239
        %v284 = vunpack.c.l.b16 %v240
        %v285 = vunpack.c.l.b16 %v241
        %v286 = vunpack.c.l.b16 %v242
        %v287 = vunpack.c.l.b16 %v243
        %v288 = vpack.c.b16 %v273, %v272
        %v289 = vpack.c.b16 %v275, %v274
        %v290 = vpack.c.b16 %v277, %v276
        %v291 = vpack.c.b16 %v279, %v278
        %v292 = vpack.c.b16 %v281, %v280
        %v293 = vpack.c.b16 %v283, %v282
        %v294 = vpack.c.b16 %v285, %v284
        %v295 = vpack.c.b16 %v287, %v286
        %v304 = vunpack.c.l.b16 %v244
        %v305 = vunpack.c.l.b16 %v245
        %v306 = vunpack.c.l.b16 %v246
        %v307 = vunpack.c.l.b16 %v247
        %v308 = vunpack.c.l.b16 %v248
        %v309 = vunpack.c.l.b16 %v249
        %v310 = vunpack.c.l.b16 %v250
        %v311 = vunpack.c.l.b16 %v251
        %v312 = vpack.c.b16 %v305, %v304
        %v313 = vpack.c.b16 %v307, %v306
        %v314 = vpack.c.b16 %v309, %v308
        %v315 = vpack.c.b16 %v311, %v310
        %vm320 = vcmask 523264
        %v322 = vsel %vm320, %v288, 0
        %v325 = vsel %vm320, %v289, 0
        %v328 = vsel %vm320, %v290, 0
        %v331 = vsel %vm320, %v291, 0
        %v334 = vsel %vm320, %v292, 0
        %v337 = vsel %vm320, %v293, 0
        %v340 = vsel %vm320, %v294, 0
        %v343 = vsel %vm320, %v295, 0
        %345 = vmatprep.subr.bf16.mxu0 0
        %346 = vmatpush1.bf16.msra.mxu0 0
        %347 = vmatprep.subr.bf16.mxu0 0
        %348 = vmatpush1.bf16.msra.mxu0 0
        %349 = vmatprep.subr.bf16.mxu0 0
        %350 = vmatpush1.bf16.msra.mxu0 0
        %351 = vmatprep.subr.bf16.mxu0 0
        %352 = vmatpush1.bf16.msra.mxu0 0
        %353 = vmatprep.subr.bf16.mxu0 0
        %354 = vmatpush1.bf16.msra.mxu0 %v315
        %355 = vmatprep.subr.bf16.mxu0 0
        %356 = vmatpush1.bf16.msra.mxu0 %v314
        %357 = vmatprep.subr.bf16.mxu0 0
        %358 = vmatpush1.bf16.msra.mxu0 %v313
        %359 = vmatprep.subr.bf16.mxu0 0
        %360 = vmatpush1.bf16.msra.mxu0 %v312
        %361 = vmatprep.subr.bf16.mxu0 0
        %362 = vmatpush2.bf16.msra.mxu0 0
        %363 = vmatprep.subr.bf16.mxu0 0
        %364 = vmatpush2.bf16.msra.mxu0 0
        %365 = vmatprep.subr.bf16.mxu0 0
        %366 = vmatpush2.bf16.msra.mxu0 0
        %367 = vmatprep.subr.bf16.mxu0 0
        %368 = vmatpush2.bf16.msra.mxu0 0
        %369 = vmatprep.subr.bf16.mxu0 0
        %370 = vmatpush2.bf16.msra.mxu0 0
        %371 = vmatprep.subr.bf16.mxu0 0
        %372 = vmatpush2.bf16.msra.mxu0 0
        %373 = vmatprep.subr.bf16.mxu0 0
        %374 = vmatpush2.bf16.msra.mxu0 0
        %375 = vmatprep.subr.bf16.mxu0 0
        %376 = vmatpush2.bf16.msra.mxu0 0
        %377 = vmatprep.mubr.bf16.mxu0 0
        %378 = vmatmul.mubr.bf16.gmra.mxu0 %v322
        %v379 = vpop.f32.mrf.mxu0
        %v380 = vadd.f32 %v255, %v379
        %v381 = vpop.f32.mrf.mxu0
        %v382 = vpop.f32.mrf.mxu0
        %v383 = vadd.f32 %v255, %v382
        %v384 = vpop.f32.mrf.mxu0
        %385 = vmatprep.mubr.bf16.mxu0 0
        %386 = vmatmul.mubr.bf16.gmra.mxu0 %v325
        %v387 = vpop.f32.mrf.mxu0
        %v388 = vadd.f32 %v255, %v387
        %v389 = vpop.f32.mrf.mxu0
        %v390 = vpop.f32.mrf.mxu0
        %v391 = vadd.f32 %v255, %v390
        %v392 = vpop.f32.mrf.mxu0
        %393 = vmatprep.mubr.bf16.mxu0 0
        %394 = vmatmul.mubr.bf16.gmra.mxu0 %v328
        %v395 = vpop.f32.mrf.mxu0
        %v396 = vadd.f32 %v255, %v395
        %v397 = vpop.f32.mrf.mxu0
        %v398 = vpop.f32.mrf.mxu0
        %v399 = vadd.f32 %v255, %v398
        %v400 = vpop.f32.mrf.mxu0
        %401 = vmatprep.mubr.bf16.mxu0 0
        %402 = vmatmul.mubr.bf16.gmra.mxu0 %v331
        %v403 = vpop.f32.mrf.mxu0
        %v404 = vadd.f32 %v255, %v403
        %v405 = vpop.f32.mrf.mxu0
        %v406 = vpop.f32.mrf.mxu0
        %v407 = vadd.f32 %v255, %v406
        %v408 = vpop.f32.mrf.mxu0
        %409 = vmatprep.mubr.bf16.mxu0 0
        %410 = vmatmul.mubr.bf16.gmra.mxu0 %v334
        %v411 = vpop.f32.mrf.mxu0
        %v412 = vadd.f32 %v255, %v411
        %v413 = vpop.f32.mrf.mxu0
        %v414 = vpop.f32.mrf.mxu0
        %v415 = vadd.f32 %v255, %v414
        %v416 = vpop.f32.mrf.mxu0
        %417 = vmatprep.mubr.bf16.mxu0 0
        %418 = vmatmul.mubr.bf16.gmra.mxu0 %v337
        %v419 = vpop.f32.mrf.mxu0
        %v420 = vadd.f32 %v255, %v419
        %v421 = vpop.f32.mrf.mxu0
        %v422 = vpop.f32.mrf.mxu0
        %v423 = vadd.f32 %v255, %v422
        %v424 = vpop.f32.mrf.mxu0
        %425 = vmatprep.mubr.bf16.mxu0 0
        %426 = vmatmul.mubr.bf16.gmra.mxu0 %v340
        %v427 = vpop.f32.mrf.mxu0
        %v428 = vadd.f32 %v255, %v427
        %v429 = vpop.f32.mrf.mxu0
        %v430 = vpop.f32.mrf.mxu0
        %v431 = vadd.f32 %v255, %v430
        %v432 = vpop.f32.mrf.mxu0
        %433 = vmatprep.mubr.bf16.mxu0 0
        %434 = vmatmul.mubr.bf16.gmra.mxu0 %v343
        %v435 = vpop.f32.mrf.mxu0
        %v436 = vadd.f32 %v255, %v435
        %v437 = vpop.f32.mrf.mxu0
        %v438 = vpop.f32.mrf.mxu0
        %v439 = vadd.f32 %v255, %v438
        %v440 = vpop.f32.mrf.mxu0
        %441 = vdwg.mxu0
        %vm442 = vcmp.ge.f32.partialorder %v380, 0.0
        %vm443 = vcmp.ge.f32.partialorder %v383, 0.0
        %vm444 = vcmp.ge.f32.partialorder %v388, 0.0
        %vm445 = vcmp.ge.f32.partialorder %v391, 0.0
        %vm446 = vcmp.ge.f32.partialorder %v396, 0.0
        %vm447 = vcmp.ge.f32.partialorder %v399, 0.0
        %vm448 = vcmp.ge.f32.partialorder %v404, 0.0
        %vm449 = vcmp.ge.f32.partialorder %v407, 0.0
        %vm450 = vcmp.ge.f32.partialorder %v412, 0.0
        %vm451 = vcmp.ge.f32.partialorder %v415, 0.0
        %vm452 = vcmp.ge.f32.partialorder %v420, 0.0
        %vm453 = vcmp.ge.f32.partialorder %v423, 0.0
        %vm454 = vcmp.ge.f32.partialorder %v428, 0.0
        %vm455 = vcmp.ge.f32.partialorder %v431, 0.0
        %vm456 = vcmp.ge.f32.partialorder %v436, 0.0
        %vm457 = vcmp.ge.f32.partialorder %v439, 0.0
        %v458 = vmul.f32 %v380, 0.01
        %v459 = vmul.f32 %v383, 0.01
        %v460 = vmul.f32 %v388, 0.01
        %v461 = vmul.f32 %v391, 0.01
        %v462 = vmul.f32 %v396, 0.01
        %v463 = vmul.f32 %v399, 0.01
        %v464 = vmul.f32 %v404, 0.01
        %v465 = vmul.f32 %v407, 0.01
        %v466 = vmul.f32 %v412, 0.01
        %v467 = vmul.f32 %v415, 0.01
        %v468 = vmul.f32 %v420, 0.01
        %v469 = vmul.f32 %v423, 0.01
        %v470 = vmul.f32 %v428, 0.01
        %v471 = vmul.f32 %v431, 0.01
        %v472 = vmul.f32 %v436, 0.01
        %v473 = vmul.f32 %v439, 0.01
        %v474 = vsel %vm442, %v380, %v458
        %v475 = vsel %vm443, %v383, %v459
        %v476 = vsel %vm444, %v388, %v460
        %v477 = vsel %vm445, %v391, %v461
        %v478 = vsel %vm446, %v396, %v462
        %v479 = vsel %vm447, %v399, %v463
        %v480 = vsel %vm448, %v404, %v464
        %v481 = vsel %vm449, %v407, %v465
        %v482 = vsel %vm450, %v412, %v466
        %v483 = vsel %vm451, %v415, %v467
        %v484 = vsel %vm452, %v420, %v468
        %v485 = vsel %vm453, %v423, %v469
        %v486 = vsel %vm454, %v428, %v470
        %v487 = vsel %vm455, %v431, %v471
        %v488 = vsel %vm456, %v436, %v472
        %v489 = vsel %vm457, %v439, %v473
        %490 = vadd.xlane.f32.xlu0 %v474
        %v491 = vpop.xlane.xlu0 %490
        %492 = vadd.xlane.f32.xlu0 %v475
        %v493 = vpop.xlane.xlu0 %492
        %494 = vadd.xlane.f32.xlu0 %v476
        %v495 = vpop.xlane.xlu0 %494
        %496 = vadd.xlane.f32.xlu0 %v477
        %v497 = vpop.xlane.xlu0 %496
        %498 = vadd.xlane.f32.xlu0 %v478
        %v499 = vpop.xlane.xlu0 %498
        %500 = vadd.xlane.f32.xlu0 %v479
        %v501 = vpop.xlane.xlu0 %500
        %502 = vadd.xlane.f32.xlu0 %v480
        %v503 = vpop.xlane.xlu0 %502
        %504 = vadd.xlane.f32.xlu0 %v481
        %v505 = vpop.xlane.xlu0 %504
        %506 = vadd.xlane.f32.xlu0 %v482
        %v507 = vpop.xlane.xlu0 %506
        %508 = vadd.xlane.f32.xlu0 %v483
        %v509 = vpop.xlane.xlu0 %508
        %510 = vadd.xlane.f32.xlu0 %v484
        %v511 = vpop.xlane.xlu0 %510
        %512 = vadd.xlane.f32.xlu0 %v485
        %v513 = vpop.xlane.xlu0 %512
        %514 = vadd.xlane.f32.xlu0 %v486
        %v515 = vpop.xlane.xlu0 %514
        %516 = vadd.xlane.f32.xlu0 %v487
        %v517 = vpop.xlane.xlu0 %516
        %518 = vadd.xlane.f32.xlu0 %v488
        %v519 = vpop.xlane.xlu0 %518
        %520 = vadd.xlane.f32.xlu0 %v489
        %v521 = vpop.xlane.xlu0 %520
        %v522 = vmul.f32 %v491, 0.0078125
        %v523 = vmul.f32 %v493, 0.0078125
        %v524 = vmul.f32 %v495, 0.0078125
        %v525 = vmul.f32 %v497, 0.0078125
        %v526 = vmul.f32 %v499, 0.0078125
        %v527 = vmul.f32 %v501, 0.0078125
        %v528 = vmul.f32 %v503, 0.0078125
        %v529 = vmul.f32 %v505, 0.0078125
        %v530 = vmul.f32 %v507, 0.0078125
        %v531 = vmul.f32 %v509, 0.0078125
        %v532 = vmul.f32 %v511, 0.0078125
        %v533 = vmul.f32 %v513, 0.0078125
        %v534 = vmul.f32 %v515, 0.0078125
        %v535 = vmul.f32 %v517, 0.0078125
        %v536 = vmul.f32 %v519, 0.0078125
        %v537 = vmul.f32 %v521, 0.0078125
        %v538 = vsub.f32 %v474, %v522
        %v539 = vsub.f32 %v475, %v523
        %v540 = vsub.f32 %v476, %v524
        %v541 = vsub.f32 %v477, %v525
        %v542 = vsub.f32 %v478, %v526
        %v543 = vsub.f32 %v479, %v527
        %v544 = vsub.f32 %v480, %v528
        %v545 = vsub.f32 %v481, %v529
        %v546 = vsub.f32 %v482, %v530
        %v547 = vsub.f32 %v483, %v531
        %v548 = vsub.f32 %v484, %v532
        %v549 = vsub.f32 %v485, %v533
        %v550 = vsub.f32 %v486, %v534
        %v551 = vsub.f32 %v487, %v535
        %v552 = vsub.f32 %v488, %v536
        %v553 = vsub.f32 %v489, %v537
        %v554 = vmul.f32 %v538, %v538
        %v555 = vmul.f32 %v539, %v539
        %v556 = vmul.f32 %v540, %v540
        %v557 = vmul.f32 %v541, %v541
        %v558 = vmul.f32 %v542, %v542
        %v559 = vmul.f32 %v543, %v543
        %v560 = vmul.f32 %v544, %v544
        %v561 = vmul.f32 %v545, %v545
        %v562 = vmul.f32 %v546, %v546
        %v563 = vmul.f32 %v547, %v547
        %v564 = vmul.f32 %v548, %v548
        %v565 = vmul.f32 %v549, %v549
        %v566 = vmul.f32 %v550, %v550
        %v567 = vmul.f32 %v551, %v551
        %v568 = vmul.f32 %v552, %v552
        %v569 = vmul.f32 %v553, %v553
        %570 = vadd.xlane.f32.xlu0 %v554
        %v571 = vpop.xlane.xlu0 %570
        %572 = vadd.xlane.f32.xlu0 %v555
        %v573 = vpop.xlane.xlu0 %572
        %574 = vadd.xlane.f32.xlu0 %v556
        %v575 = vpop.xlane.xlu0 %574
        %576 = vadd.xlane.f32.xlu0 %v557
        %v577 = vpop.xlane.xlu0 %576
        %578 = vadd.xlane.f32.xlu0 %v558
        %v579 = vpop.xlane.xlu0 %578
        %580 = vadd.xlane.f32.xlu0 %v559
        %v581 = vpop.xlane.xlu0 %580
        %582 = vadd.xlane.f32.xlu0 %v560
        %v583 = vpop.xlane.xlu0 %582
        %584 = vadd.xlane.f32.xlu0 %v561
        %v585 = vpop.xlane.xlu0 %584
        %586 = vadd.xlane.f32.xlu0 %v562
        %v587 = vpop.xlane.xlu0 %586
        %588 = vadd.xlane.f32.xlu0 %v563
        %v589 = vpop.xlane.xlu0 %588
        %590 = vadd.xlane.f32.xlu0 %v564
        %v591 = vpop.xlane.xlu0 %590
        %592 = vadd.xlane.f32.xlu0 %v565
        %v593 = vpop.xlane.xlu0 %592
        %594 = vadd.xlane.f32.xlu0 %v566
        %v595 = vpop.xlane.xlu0 %594
        %596 = vadd.xlane.f32.xlu0 %v567
        %v597 = vpop.xlane.xlu0 %596
        %598 = vadd.xlane.f32.xlu0 %v568
        %v599 = vpop.xlane.xlu0 %598
        %600 = vadd.xlane.f32.xlu0 %v569
        %v601 = vpop.xlane.xlu0 %600
        %v602 = vmul.f32 %v571, 0.0078125
        %v603 = vmul.f32 %v573, 0.0078125
        %v604 = vmul.f32 %v575, 0.0078125
        %v605 = vmul.f32 %v577, 0.0078125
        %v606 = vmul.f32 %v579, 0.0078125
        %v607 = vmul.f32 %v581, 0.0078125
        %v608 = vmul.f32 %v583, 0.0078125
        %v609 = vmul.f32 %v585, 0.0078125
        %v610 = vmul.f32 %v587, 0.0078125
        %v611 = vmul.f32 %v589, 0.0078125
        %v612 = vmul.f32 %v591, 0.0078125
        %v613 = vmul.f32 %v593, 0.0078125
        %v614 = vmul.f32 %v595, 0.0078125
        %v615 = vmul.f32 %v597, 0.0078125
        %v616 = vmul.f32 %v599, 0.0078125
        %v617 = vmul.f32 %v601, 0.0078125
        %v618 = vadd.f32 %v602, 1e-05
        %v619 = vadd.f32 %v603, 1e-05
        %v620 = vadd.f32 %v604, 1e-05
        %v621 = vadd.f32 %v605, 1e-05
        %v622 = vadd.f32 %v606, 1e-05
        %v623 = vadd.f32 %v607, 1e-05
        %v624 = vadd.f32 %v608, 1e-05
        %v625 = vadd.f32 %v609, 1e-05
        %v626 = vadd.f32 %v610, 1e-05
        %v627 = vadd.f32 %v611, 1e-05
        %v628 = vadd.f32 %v612, 1e-05
        %v629 = vadd.f32 %v613, 1e-05
        %v630 = vadd.f32 %v614, 1e-05
        %v631 = vadd.f32 %v615, 1e-05
        %v632 = vadd.f32 %v616, 1e-05
        %v633 = vadd.f32 %v617, 1e-05
        %v634 = vrsqrt.pop %v618
        %v635 = vrsqrt.pop %v619
        %v636 = vrsqrt.pop %v620
        %v637 = vrsqrt.pop %v621
        %v638 = vrsqrt.pop %v622
        %v639 = vrsqrt.pop %v623
        %v640 = vrsqrt.pop %v624
        %v641 = vrsqrt.pop %v625
        %v642 = vrsqrt.pop %v626
        %v643 = vrsqrt.pop %v627
        %v644 = vrsqrt.pop %v628
        %v645 = vrsqrt.pop %v629
        %v646 = vrsqrt.pop %v630
        %v647 = vrsqrt.pop %v631
        %v648 = vrsqrt.pop %v632
        %v649 = vrsqrt.pop %v633
        %v650 = vmul.f32 %v538, %v634
        %v651 = vmul.f32 %v539, %v635
        %v652 = vmul.f32 %v540, %v636
        %v653 = vmul.f32 %v541, %v637
        %v654 = vmul.f32 %v542, %v638
        %v655 = vmul.f32 %v543, %v639
        %v656 = vmul.f32 %v544, %v640
        %v657 = vmul.f32 %v545, %v641
        %v658 = vmul.f32 %v546, %v642
        %v659 = vmul.f32 %v547, %v643
        %v660 = vmul.f32 %v548, %v644
        %v661 = vmul.f32 %v549, %v645
        %v662 = vmul.f32 %v550, %v646
        %v663 = vmul.f32 %v551, %v647
        %v664 = vmul.f32 %v552, %v648
        %v665 = vmul.f32 %v553, %v649
        %v666 = vpack.c.bf16 %v651, %v650
        %v667 = vpack.c.bf16 %v653, %v652
        %v668 = vpack.c.bf16 %v655, %v654
        %v669 = vpack.c.bf16 %v657, %v656
        %v670 = vpack.c.bf16 %v659, %v658
        %v671 = vpack.c.bf16 %v661, %v660
        %v672 = vpack.c.bf16 %v663, %v662
        %v673 = vpack.c.bf16 %v665, %v664
        %v674 = vld [vmem:[%s2] sm:$0xf]
        %v675 = vld [vmem:[%s2 + $0x4] sm:$0xf]
        %v676 = vld [vmem:[%s2 + $0x8] sm:$0xf]
        %v677 = vld [vmem:[%s2 + $0xc] sm:$0xf]
        %v678 = vld [vmem:[%s2 + $0x10] sm:$0xf]
        %v679 = vld [vmem:[%s2 + $0x14] sm:$0xf]
        %v680 = vld [vmem:[%s2 + $0x18] sm:$0xf]
        %v681 = vld [vmem:[%s2 + $0x1c] sm:$0xf]
        %v682 = vld [vmem:[%s2 + $0x20] sm:$0xf]
        %v683 = vld [vmem:[%s2 + $0x24] sm:$0xf]
        %v684 = vld [vmem:[%s2 + $0x28] sm:$0xf]
        %v685 = vld [vmem:[%s2 + $0x2c] sm:$0xf]
        %v686 = vld [vmem:[%s2 + $0x30] sm:$0xf]
        %v687 = vld [vmem:[%s2 + $0x34] sm:$0xf]
        %v688 = vld [vmem:[%s2 + $0x38] sm:$0xf]
        %v689 = vld [vmem:[%s2 + $0x3c] sm:$0xf]
        %v690 = vlaneseq
        %v691 = vshrl.u32 %v690, 7
        %v692 = vsub.s32 1, %v691
        %v693 = vrot.slane %v227, %v692
        %v710 = vunpack.c.l.b16 %v674
        %v711 = vunpack.c.l.b16 %v675
        %v712 = vunpack.c.l.b16 %v676
        %v713 = vunpack.c.l.b16 %v677
        %v714 = vunpack.c.l.b16 %v678
        %v715 = vunpack.c.l.b16 %v679
        %v716 = vunpack.c.l.b16 %v680
        %v717 = vunpack.c.l.b16 %v681
        %v718 = vunpack.c.l.b16 %v682
        %v719 = vunpack.c.l.b16 %v683
        %v720 = vunpack.c.l.b16 %v684
        %v721 = vunpack.c.l.b16 %v685
        %v722 = vunpack.c.l.b16 %v686
        %v723 = vunpack.c.l.b16 %v687
        %v724 = vunpack.c.l.b16 %v688
        %v725 = vunpack.c.l.b16 %v689
        %v726 = vpack.c.b16 %v711, %v710
        %v727 = vpack.c.b16 %v713, %v712
        %v728 = vpack.c.b16 %v715, %v714
        %v729 = vpack.c.b16 %v717, %v716
        %v730 = vpack.c.b16 %v719, %v718
        %v731 = vpack.c.b16 %v721, %v720
        %v732 = vpack.c.b16 %v723, %v722
        %v733 = vpack.c.b16 %v725, %v724
        %742 = vmatprep.subr.bf16.mxu0 0
        %743 = vmatpush1.bf16.msra.mxu0 %v733
        %744 = vmatprep.subr.bf16.mxu0 0
        %745 = vmatpush1.bf16.msra.mxu0 %v732
        %746 = vmatprep.subr.bf16.mxu0 0
        %747 = vmatpush1.bf16.msra.mxu0 %v731
        %748 = vmatprep.subr.bf16.mxu0 0
        %749 = vmatpush1.bf16.msra.mxu0 %v730
        %750 = vmatprep.subr.bf16.mxu0 0
        %751 = vmatpush1.bf16.msra.mxu0 %v729
        %752 = vmatprep.subr.bf16.mxu0 0
        %753 = vmatpush1.bf16.msra.mxu0 %v728
        %754 = vmatprep.subr.bf16.mxu0 0
        %755 = vmatpush1.bf16.msra.mxu0 %v727
        %756 = vmatprep.subr.bf16.mxu0 0
        %757 = vmatpush1.bf16.msra.mxu0 %v726
        %758 = vmatprep.subr.bf16.mxu0 0
        %759 = vmatpush2.bf16.msra.mxu0 0
        %760 = vmatprep.subr.bf16.mxu0 0
        %761 = vmatpush2.bf16.msra.mxu0 0
        %762 = vmatprep.subr.bf16.mxu0 0
        %763 = vmatpush2.bf16.msra.mxu0 0
        %764 = vmatprep.subr.bf16.mxu0 0
        %765 = vmatpush2.bf16.msra.mxu0 0
        %766 = vmatprep.subr.bf16.mxu0 0
        %767 = vmatpush2.bf16.msra.mxu0 0
        %768 = vmatprep.subr.bf16.mxu0 0
        %769 = vmatpush2.bf16.msra.mxu0 0
        %770 = vmatprep.subr.bf16.mxu0 0
        %771 = vmatpush2.bf16.msra.mxu0 0
        %772 = vmatprep.subr.bf16.mxu0 0
        %773 = vmatpush2.bf16.msra.mxu0 0
        %774 = vmatprep.mubr.bf16.mxu0 0
        %775 = vmatmul.mubr.bf16.gmra.mxu0 %v666
        %v776 = vpop.f32.mrf.mxu0
        %v777 = vadd.f32 %v693, %v776
        %v778 = vpop.f32.mrf.mxu0
        %v779 = vpop.f32.mrf.mxu0
        %v780 = vadd.f32 %v693, %v779
        %v781 = vpop.f32.mrf.mxu0
        %782 = vmatprep.mubr.bf16.mxu0 0
        %783 = vmatmul.mubr.bf16.gmra.mxu0 %v667
        %v784 = vpop.f32.mrf.mxu0
        %v785 = vadd.f32 %v693, %v784
        %v786 = vpop.f32.mrf.mxu0
        %v787 = vpop.f32.mrf.mxu0
        %v788 = vadd.f32 %v693, %v787
        %v789 = vpop.f32.mrf.mxu0
        %790 = vmatprep.mubr.bf16.mxu0 0
        %791 = vmatmul.mubr.bf16.gmra.mxu0 %v668
        %v792 = vpop.f32.mrf.mxu0
        %v793 = vadd.f32 %v693, %v792
        %v794 = vpop.f32.mrf.mxu0
        %v795 = vpop.f32.mrf.mxu0
        %v796 = vadd.f32 %v693, %v795
        %v797 = vpop.f32.mrf.mxu0
        %798 = vmatprep.mubr.bf16.mxu0 0
        %799 = vmatmul.mubr.bf16.gmra.mxu0 %v669
        %v800 = vpop.f32.mrf.mxu0
        %v801 = vadd.f32 %v693, %v800
        %v802 = vpop.f32.mrf.mxu0
        %v803 = vpop.f32.mrf.mxu0
        %v804 = vadd.f32 %v693, %v803
        %v805 = vpop.f32.mrf.mxu0
        %806 = vmatprep.mubr.bf16.mxu0 0
        %807 = vmatmul.mubr.bf16.gmra.mxu0 %v670
        %v808 = vpop.f32.mrf.mxu0
        %v809 = vadd.f32 %v693, %v808
        %v810 = vpop.f32.mrf.mxu0
        %v811 = vpop.f32.mrf.mxu0
        %v812 = vadd.f32 %v693, %v811
        %v813 = vpop.f32.mrf.mxu0
        %814 = vmatprep.mubr.bf16.mxu0 0
        %815 = vmatmul.mubr.bf16.gmra.mxu0 %v671
        %v816 = vpop.f32.mrf.mxu0
        %v817 = vadd.f32 %v693, %v816
        %v818 = vpop.f32.mrf.mxu0
        %v819 = vpop.f32.mrf.mxu0
        %v820 = vadd.f32 %v693, %v819
        %v821 = vpop.f32.mrf.mxu0
        %822 = vmatprep.mubr.bf16.mxu0 0
        %823 = vmatmul.mubr.bf16.gmra.mxu0 %v672
        %v824 = vpop.f32.mrf.mxu0
        %v825 = vadd.f32 %v693, %v824
        %v826 = vpop.f32.mrf.mxu0
        %v827 = vpop.f32.mrf.mxu0
        %v828 = vadd.f32 %v693, %v827
        %v829 = vpop.f32.mrf.mxu0
        %830 = vmatprep.mubr.bf16.mxu0 0
        %831 = vmatmul.mubr.bf16.gmra.mxu0 %v673
        %v832 = vpop.f32.mrf.mxu0
        %v833 = vadd.f32 %v693, %v832
        %v834 = vpop.f32.mrf.mxu0
        %v835 = vpop.f32.mrf.mxu0
        %v836 = vadd.f32 %v693, %v835
        %v837 = vpop.f32.mrf.mxu0
        %838 = vdwg.mxu0
        %vm839 = vcmp.ge.f32.partialorder %v777, 0.0
        %vm840 = vcmp.ge.f32.partialorder %v780, 0.0
        %vm841 = vcmp.ge.f32.partialorder %v785, 0.0
        %vm842 = vcmp.ge.f32.partialorder %v788, 0.0
        %vm843 = vcmp.ge.f32.partialorder %v793, 0.0
        %vm844 = vcmp.ge.f32.partialorder %v796, 0.0
        %vm845 = vcmp.ge.f32.partialorder %v801, 0.0
        %vm846 = vcmp.ge.f32.partialorder %v804, 0.0
        %vm847 = vcmp.ge.f32.partialorder %v809, 0.0
        %vm848 = vcmp.ge.f32.partialorder %v812, 0.0
        %vm849 = vcmp.ge.f32.partialorder %v817, 0.0
        %vm850 = vcmp.ge.f32.partialorder %v820, 0.0
        %vm851 = vcmp.ge.f32.partialorder %v825, 0.0
        %vm852 = vcmp.ge.f32.partialorder %v828, 0.0
        %vm853 = vcmp.ge.f32.partialorder %v833, 0.0
        %vm854 = vcmp.ge.f32.partialorder %v836, 0.0
        %v855 = vmul.f32 %v777, 0.01
        %v856 = vmul.f32 %v780, 0.01
        %v857 = vmul.f32 %v785, 0.01
        %v858 = vmul.f32 %v788, 0.01
        %v859 = vmul.f32 %v793, 0.01
        %v860 = vmul.f32 %v796, 0.01
        %v861 = vmul.f32 %v801, 0.01
        %v862 = vmul.f32 %v804, 0.01
        %v863 = vmul.f32 %v809, 0.01
        %v864 = vmul.f32 %v812, 0.01
        %v865 = vmul.f32 %v817, 0.01
        %v866 = vmul.f32 %v820, 0.01
        %v867 = vmul.f32 %v825, 0.01
        %v868 = vmul.f32 %v828, 0.01
        %v869 = vmul.f32 %v833, 0.01
        %v870 = vmul.f32 %v836, 0.01
        %v871 = vsel %vm839, %v777, %v855
        %v872 = vsel %vm840, %v780, %v856
        %v873 = vsel %vm841, %v785, %v857
        %v874 = vsel %vm842, %v788, %v858
        %v875 = vsel %vm843, %v793, %v859
        %v876 = vsel %vm844, %v796, %v860
        %v877 = vsel %vm845, %v801, %v861
        %v878 = vsel %vm846, %v804, %v862
        %v879 = vsel %vm847, %v809, %v863
        %v880 = vsel %vm848, %v812, %v864
        %v881 = vsel %vm849, %v817, %v865
        %v882 = vsel %vm850, %v820, %v866
        %v883 = vsel %vm851, %v825, %v867
        %v884 = vsel %vm852, %v828, %v868
        %v885 = vsel %vm853, %v833, %v869
        %v886 = vsel %vm854, %v836, %v870
        %887 = vadd.xlane.f32.xlu0 %v871
        %v888 = vpop.xlane.xlu0 %887
        %889 = vadd.xlane.f32.xlu0 %v872
        %v890 = vpop.xlane.xlu0 %889
        %891 = vadd.xlane.f32.xlu0 %v873
        %v892 = vpop.xlane.xlu0 %891
        %893 = vadd.xlane.f32.xlu0 %v874
        %v894 = vpop.xlane.xlu0 %893
        %895 = vadd.xlane.f32.xlu0 %v875
        %v896 = vpop.xlane.xlu0 %895
        %897 = vadd.xlane.f32.xlu0 %v876
        %v898 = vpop.xlane.xlu0 %897
        %899 = vadd.xlane.f32.xlu0 %v877
        %v900 = vpop.xlane.xlu0 %899
        %901 = vadd.xlane.f32.xlu0 %v878
        %v902 = vpop.xlane.xlu0 %901
        %903 = vadd.xlane.f32.xlu0 %v879
        %v904 = vpop.xlane.xlu0 %903
        %905 = vadd.xlane.f32.xlu0 %v880
        %v906 = vpop.xlane.xlu0 %905
        %907 = vadd.xlane.f32.xlu0 %v881
        %v908 = vpop.xlane.xlu0 %907
        %909 = vadd.xlane.f32.xlu0 %v882
        %v910 = vpop.xlane.xlu0 %909
        %911 = vadd.xlane.f32.xlu0 %v883
        %v912 = vpop.xlane.xlu0 %911
        %913 = vadd.xlane.f32.xlu0 %v884
        %v914 = vpop.xlane.xlu0 %913
        %915 = vadd.xlane.f32.xlu0 %v885
        %v916 = vpop.xlane.xlu0 %915
        %917 = vadd.xlane.f32.xlu0 %v886
        %v918 = vpop.xlane.xlu0 %917
        %v919 = vmul.f32 %v888, 0.0078125
        %v920 = vmul.f32 %v890, 0.0078125
        %v921 = vmul.f32 %v892, 0.0078125
        %v922 = vmul.f32 %v894, 0.0078125
        %v923 = vmul.f32 %v896, 0.0078125
        %v924 = vmul.f32 %v898, 0.0078125
        %v925 = vmul.f32 %v900, 0.0078125
        %v926 = vmul.f32 %v902, 0.0078125
        %v927 = vmul.f32 %v904, 0.0078125
        %v928 = vmul.f32 %v906, 0.0078125
        %v929 = vmul.f32 %v908, 0.0078125
        %v930 = vmul.f32 %v910, 0.0078125
        %v931 = vmul.f32 %v912, 0.0078125
        %v932 = vmul.f32 %v914, 0.0078125
        %v933 = vmul.f32 %v916, 0.0078125
        %v934 = vmul.f32 %v918, 0.0078125
        %v935 = vsub.f32 %v871, %v919
        %v936 = vsub.f32 %v872, %v920
        %v937 = vsub.f32 %v873, %v921
        %v938 = vsub.f32 %v874, %v922
        %v939 = vsub.f32 %v875, %v923
        %v940 = vsub.f32 %v876, %v924
        %v941 = vsub.f32 %v877, %v925
        %v942 = vsub.f32 %v878, %v926
        %v943 = vsub.f32 %v879, %v927
        %v944 = vsub.f32 %v880, %v928
        %v945 = vsub.f32 %v881, %v929
        %v946 = vsub.f32 %v882, %v930
        %v947 = vsub.f32 %v883, %v931
        %v948 = vsub.f32 %v884, %v932
        %v949 = vsub.f32 %v885, %v933
        %v950 = vsub.f32 %v886, %v934
        %v951 = vmul.f32 %v935, %v935
        %v952 = vmul.f32 %v936, %v936
        %v953 = vmul.f32 %v937, %v937
        %v954 = vmul.f32 %v938, %v938
        %v955 = vmul.f32 %v939, %v939
        %v956 = vmul.f32 %v940, %v940
        %v957 = vmul.f32 %v941, %v941
        %v958 = vmul.f32 %v942, %v942
        %v959 = vmul.f32 %v943, %v943
        %v960 = vmul.f32 %v944, %v944
        %v961 = vmul.f32 %v945, %v945
        %v962 = vmul.f32 %v946, %v946
        %v963 = vmul.f32 %v947, %v947
        %v964 = vmul.f32 %v948, %v948
        %v965 = vmul.f32 %v949, %v949
        %v966 = vmul.f32 %v950, %v950
        %967 = vadd.xlane.f32.xlu0 %v951
        %v968 = vpop.xlane.xlu0 %967
        %969 = vadd.xlane.f32.xlu0 %v952
        %v970 = vpop.xlane.xlu0 %969
        %971 = vadd.xlane.f32.xlu0 %v953
        %v972 = vpop.xlane.xlu0 %971
        %973 = vadd.xlane.f32.xlu0 %v954
        %v974 = vpop.xlane.xlu0 %973
        %975 = vadd.xlane.f32.xlu0 %v955
        %v976 = vpop.xlane.xlu0 %975
        %977 = vadd.xlane.f32.xlu0 %v956
        %v978 = vpop.xlane.xlu0 %977
        %979 = vadd.xlane.f32.xlu0 %v957
        %v980 = vpop.xlane.xlu0 %979
        %981 = vadd.xlane.f32.xlu0 %v958
        %v982 = vpop.xlane.xlu0 %981
        %983 = vadd.xlane.f32.xlu0 %v959
        %v984 = vpop.xlane.xlu0 %983
        %985 = vadd.xlane.f32.xlu0 %v960
        %v986 = vpop.xlane.xlu0 %985
        %987 = vadd.xlane.f32.xlu0 %v961
        %v988 = vpop.xlane.xlu0 %987
        %989 = vadd.xlane.f32.xlu0 %v962
        %v990 = vpop.xlane.xlu0 %989
        %991 = vadd.xlane.f32.xlu0 %v963
        %v992 = vpop.xlane.xlu0 %991
        %993 = vadd.xlane.f32.xlu0 %v964
        %v994 = vpop.xlane.xlu0 %993
        %995 = vadd.xlane.f32.xlu0 %v965
        %v996 = vpop.xlane.xlu0 %995
        %997 = vadd.xlane.f32.xlu0 %v966
        %v998 = vpop.xlane.xlu0 %997
        %v999 = vmul.f32 %v968, 0.0078125
        %v1000 = vmul.f32 %v970, 0.0078125
        %v1001 = vmul.f32 %v972, 0.0078125
        %v1002 = vmul.f32 %v974, 0.0078125
        %v1003 = vmul.f32 %v976, 0.0078125
        %v1004 = vmul.f32 %v978, 0.0078125
        %v1005 = vmul.f32 %v980, 0.0078125
        %v1006 = vmul.f32 %v982, 0.0078125
        %v1007 = vmul.f32 %v984, 0.0078125
        %v1008 = vmul.f32 %v986, 0.0078125
        %v1009 = vmul.f32 %v988, 0.0078125
        %v1010 = vmul.f32 %v990, 0.0078125
        %v1011 = vmul.f32 %v992, 0.0078125
        %v1012 = vmul.f32 %v994, 0.0078125
        %v1013 = vmul.f32 %v996, 0.0078125
        %v1014 = vmul.f32 %v998, 0.0078125
        %v1015 = vadd.f32 %v999, 1e-05
        %v1016 = vadd.f32 %v1000, 1e-05
        %v1017 = vadd.f32 %v1001, 1e-05
        %v1018 = vadd.f32 %v1002, 1e-05
        %v1019 = vadd.f32 %v1003, 1e-05
        %v1020 = vadd.f32 %v1004, 1e-05
        %v1021 = vadd.f32 %v1005, 1e-05
        %v1022 = vadd.f32 %v1006, 1e-05
        %v1023 = vadd.f32 %v1007, 1e-05
        %v1024 = vadd.f32 %v1008, 1e-05
        %v1025 = vadd.f32 %v1009, 1e-05
        %v1026 = vadd.f32 %v1010, 1e-05
        %v1027 = vadd.f32 %v1011, 1e-05
        %v1028 = vadd.f32 %v1012, 1e-05
        %v1029 = vadd.f32 %v1013, 1e-05
        %v1030 = vadd.f32 %v1014, 1e-05
        %v1031 = vrsqrt.pop %v1015
        %v1032 = vrsqrt.pop %v1016
        %v1033 = vrsqrt.pop %v1017
        %v1034 = vrsqrt.pop %v1018
        %v1035 = vrsqrt.pop %v1019
        %v1036 = vrsqrt.pop %v1020
        %v1037 = vrsqrt.pop %v1021
        %v1038 = vrsqrt.pop %v1022
        %v1039 = vrsqrt.pop %v1023
        %v1040 = vrsqrt.pop %v1024
        %v1041 = vrsqrt.pop %v1025
        %v1042 = vrsqrt.pop %v1026
        %v1043 = vrsqrt.pop %v1027
        %v1044 = vrsqrt.pop %v1028
        %v1045 = vrsqrt.pop %v1029
        %v1046 = vrsqrt.pop %v1030
        %v1047 = vmul.f32 %v935, %v1031
        %v1048 = vmul.f32 %v936, %v1032
        %v1049 = vmul.f32 %v937, %v1033
        %v1050 = vmul.f32 %v938, %v1034
        %v1051 = vmul.f32 %v939, %v1035
        %v1052 = vmul.f32 %v940, %v1036
        %v1053 = vmul.f32 %v941, %v1037
        %v1054 = vmul.f32 %v942, %v1038
        %v1055 = vmul.f32 %v943, %v1039
        %v1056 = vmul.f32 %v944, %v1040
        %v1057 = vmul.f32 %v945, %v1041
        %v1058 = vmul.f32 %v946, %v1042
        %v1059 = vmul.f32 %v947, %v1043
        %v1060 = vmul.f32 %v948, %v1044
        %v1061 = vmul.f32 %v949, %v1045
        %v1062 = vmul.f32 %v950, %v1046
        %v1063 = vpack.c.bf16 %v1048, %v1047
        %v1064 = vpack.c.bf16 %v1050, %v1049
        %v1065 = vpack.c.bf16 %v1052, %v1051
        %v1066 = vpack.c.bf16 %v1054, %v1053
        %v1067 = vpack.c.bf16 %v1056, %v1055
        %v1068 = vpack.c.bf16 %v1058, %v1057
        %v1069 = vpack.c.bf16 %v1060, %v1059
        %v1070 = vpack.c.bf16 %v1062, %v1061
        %v1071 = vld [vmem:[%s3] sm:$0xf]
        %v1072 = vld [vmem:[%s3 + $0x4] sm:$0xf]
        %v1073 = vld [vmem:[%s3 + $0x8] sm:$0xf]
        %v1074 = vld [vmem:[%s3 + $0xc] sm:$0xf]
        %v1075 = vld [vmem:[%s3 + $0x10] sm:$0xf]
        %v1076 = vld [vmem:[%s3 + $0x14] sm:$0xf]
        %v1077 = vld [vmem:[%s3 + $0x18] sm:$0xf]
        %v1078 = vld [vmem:[%s3 + $0x1c] sm:$0xf]
        %v1079 = vld [vmem:[%s3 + $0x20] sm:$0xf]
        %v1080 = vld [vmem:[%s3 + $0x24] sm:$0xf]
        %v1081 = vld [vmem:[%s3 + $0x28] sm:$0xf]
        %v1082 = vld [vmem:[%s3 + $0x2c] sm:$0xf]
        %v1083 = vld [vmem:[%s3 + $0x30] sm:$0xf]
        %v1084 = vld [vmem:[%s3 + $0x34] sm:$0xf]
        %v1085 = vld [vmem:[%s3 + $0x38] sm:$0xf]
        %v1086 = vld [vmem:[%s3 + $0x3c] sm:$0xf]
        %v1087 = vlaneseq
        %v1088 = vshrl.u32 %v1087, 7
        %v1089 = vsub.s32 2, %v1088
        %v1090 = vrot.slane %v227, %v1089
        %v1107 = vunpack.c.l.b16 %v1071
        %v1108 = vunpack.c.l.b16 %v1072
        %v1109 = vunpack.c.l.b16 %v1073
        %v1110 = vunpack.c.l.b16 %v1074
        %v1111 = vunpack.c.l.b16 %v1075
        %v1112 = vunpack.c.l.b16 %v1076
        %v1113 = vunpack.c.l.b16 %v1077
        %v1114 = vunpack.c.l.b16 %v1078
        %v1115 = vunpack.c.l.b16 %v1079
        %v1116 = vunpack.c.l.b16 %v1080
        %v1117 = vunpack.c.l.b16 %v1081
        %v1118 = vunpack.c.l.b16 %v1082
        %v1119 = vunpack.c.l.b16 %v1083
        %v1120 = vunpack.c.l.b16 %v1084
        %v1121 = vunpack.c.l.b16 %v1085
        %v1122 = vunpack.c.l.b16 %v1086
        %v1123 = vpack.c.b16 %v1108, %v1107
        %v1124 = vpack.c.b16 %v1110, %v1109
        %v1125 = vpack.c.b16 %v1112, %v1111
        %v1126 = vpack.c.b16 %v1114, %v1113
        %v1127 = vpack.c.b16 %v1116, %v1115
        %v1128 = vpack.c.b16 %v1118, %v1117
        %v1129 = vpack.c.b16 %v1120, %v1119
        %v1130 = vpack.c.b16 %v1122, %v1121
        %1139 = vmatprep.subr.bf16.mxu0 0
        %1140 = vmatpush1.bf16.msra.mxu0 %v1130
        %1141 = vmatprep.subr.bf16.mxu0 0
        %1142 = vmatpush1.bf16.msra.mxu0 %v1129
        %1143 = vmatprep.subr.bf16.mxu0 0
        %1144 = vmatpush1.bf16.msra.mxu0 %v1128
        %1145 = vmatprep.subr.bf16.mxu0 0
        %1146 = vmatpush1.bf16.msra.mxu0 %v1127
        %1147 = vmatprep.subr.bf16.mxu0 0
        %1148 = vmatpush1.bf16.msra.mxu0 %v1126
        %1149 = vmatprep.subr.bf16.mxu0 0
        %1150 = vmatpush1.bf16.msra.mxu0 %v1125
        %1151 = vmatprep.subr.bf16.mxu0 0
        %1152 = vmatpush1.bf16.msra.mxu0 %v1124
        %1153 = vmatprep.subr.bf16.mxu0 0
        %1154 = vmatpush1.bf16.msra.mxu0 %v1123
        %1155 = vmatprep.subr.bf16.mxu0 0
        %1156 = vmatpush2.bf16.msra.mxu0 0
        %1157 = vmatprep.subr.bf16.mxu0 0
        %1158 = vmatpush2.bf16.msra.mxu0 0
        %1159 = vmatprep.subr.bf16.mxu0 0
        %1160 = vmatpush2.bf16.msra.mxu0 0
        %1161 = vmatprep.subr.bf16.mxu0 0
        %1162 = vmatpush2.bf16.msra.mxu0 0
        %1163 = vmatprep.subr.bf16.mxu0 0
        %1164 = vmatpush2.bf16.msra.mxu0 0
        %1165 = vmatprep.subr.bf16.mxu0 0
        %1166 = vmatpush2.bf16.msra.mxu0 0
        %1167 = vmatprep.subr.bf16.mxu0 0
        %1168 = vmatpush2.bf16.msra.mxu0 0
        %1169 = vmatprep.subr.bf16.mxu0 0
        %1170 = vmatpush2.bf16.msra.mxu0 0
        %1171 = vmatprep.mubr.bf16.mxu0 0
        %1172 = vmatmul.mubr.bf16.gmra.mxu0 %v1063
        %v1173 = vpop.f32.mrf.mxu0
        %v1174 = vadd.f32 %v1090, %v1173
        %v1175 = vpop.f32.mrf.mxu0
        %v1176 = vpop.f32.mrf.mxu0
        %v1177 = vadd.f32 %v1090, %v1176
        %v1178 = vpop.f32.mrf.mxu0
        %1179 = vmatprep.mubr.bf16.mxu0 0
        %1180 = vmatmul.mubr.bf16.gmra.mxu0 %v1064
        %v1181 = vpop.f32.mrf.mxu0
        %v1182 = vadd.f32 %v1090, %v1181
        %v1183 = vpop.f32.mrf.mxu0
        %v1184 = vpop.f32.mrf.mxu0
        %v1185 = vadd.f32 %v1090, %v1184
        %v1186 = vpop.f32.mrf.mxu0
        %1187 = vmatprep.mubr.bf16.mxu0 0
        %1188 = vmatmul.mubr.bf16.gmra.mxu0 %v1065
        %v1189 = vpop.f32.mrf.mxu0
        %v1190 = vadd.f32 %v1090, %v1189
        %v1191 = vpop.f32.mrf.mxu0
        %v1192 = vpop.f32.mrf.mxu0
        %v1193 = vadd.f32 %v1090, %v1192
        %v1194 = vpop.f32.mrf.mxu0
        %1195 = vmatprep.mubr.bf16.mxu0 0
        %1196 = vmatmul.mubr.bf16.gmra.mxu0 %v1066
        %v1197 = vpop.f32.mrf.mxu0
        %v1198 = vadd.f32 %v1090, %v1197
        %v1199 = vpop.f32.mrf.mxu0
        %v1200 = vpop.f32.mrf.mxu0
        %v1201 = vadd.f32 %v1090, %v1200
        %v1202 = vpop.f32.mrf.mxu0
        %1203 = vmatprep.mubr.bf16.mxu0 0
        %1204 = vmatmul.mubr.bf16.gmra.mxu0 %v1067
        %v1205 = vpop.f32.mrf.mxu0
        %v1206 = vadd.f32 %v1090, %v1205
        %v1207 = vpop.f32.mrf.mxu0
        %v1208 = vpop.f32.mrf.mxu0
        %v1209 = vadd.f32 %v1090, %v1208
        %v1210 = vpop.f32.mrf.mxu0
        %1211 = vmatprep.mubr.bf16.mxu0 0
        %1212 = vmatmul.mubr.bf16.gmra.mxu0 %v1068
        %v1213 = vpop.f32.mrf.mxu0
        %v1214 = vadd.f32 %v1090, %v1213
        %v1215 = vpop.f32.mrf.mxu0
        %v1216 = vpop.f32.mrf.mxu0
        %v1217 = vadd.f32 %v1090, %v1216
        %v1218 = vpop.f32.mrf.mxu0
        %1219 = vmatprep.mubr.bf16.mxu0 0
        %1220 = vmatmul.mubr.bf16.gmra.mxu0 %v1069
        %v1221 = vpop.f32.mrf.mxu0
        %v1222 = vadd.f32 %v1090, %v1221
        %v1223 = vpop.f32.mrf.mxu0
        %v1224 = vpop.f32.mrf.mxu0
        %v1225 = vadd.f32 %v1090, %v1224
        %v1226 = vpop.f32.mrf.mxu0
        %1227 = vmatprep.mubr.bf16.mxu0 0
        %1228 = vmatmul.mubr.bf16.gmra.mxu0 %v1070
        %v1229 = vpop.f32.mrf.mxu0
        %v1230 = vadd.f32 %v1090, %v1229
        %v1231 = vpop.f32.mrf.mxu0
        %v1232 = vpop.f32.mrf.mxu0
        %v1233 = vadd.f32 %v1090, %v1232
        %v1234 = vpop.f32.mrf.mxu0
        %1235 = vdwg.mxu0
        %1236 = vst [vmem:[%s218] sm:$0xff] %v1174
        %1237 = vst [vmem:[%s218 + $0x8] sm:$0xff] %v1177
        %1238 = vst [vmem:[%s218 + $0x10] sm:$0xff] %v1182
        %1239 = vst [vmem:[%s218 + $0x18] sm:$0xff] %v1185
        %1240 = vst [vmem:[%s218 + $0x20] sm:$0xff] %v1190
        %1241 = vst [vmem:[%s218 + $0x28] sm:$0xff] %v1193
        %1242 = vst [vmem:[%s218 + $0x30] sm:$0xff] %v1198
        %1243 = vst [vmem:[%s218 + $0x38] sm:$0xff] %v1201
        %1244 = vst [vmem:[%s218 + $0x40] sm:$0xff] %v1206
        %1245 = vst [vmem:[%s218 + $0x48] sm:$0xff] %v1209
        %1246 = vst [vmem:[%s218 + $0x50] sm:$0xff] %v1214
        %1247 = vst [vmem:[%s218 + $0x58] sm:$0xff] %v1217
        %1248 = vst [vmem:[%s218 + $0x60] sm:$0xff] %v1222
        %1249 = vst [vmem:[%s218 + $0x68] sm:$0xff] %v1225
        %1250 = vst [vmem:[%s218 + $0x70] sm:$0xff] %v1230
        %1251 = vst [vmem:[%s218 + $0x78] sm:$0xff] %v1233
        %s1252 = sand.u32 %s137, 1
        %s1253 = scalar_lea.sflag [#allocation3], %s1252
        %s1254 = sand.u32 %s137, 1
        %s1255 = smul.addr %s1254, 128
        %s1256 = scalar_lea.vmem [#allocation2], %s1255
        // Predicated region
        $region41: #{tpu_custom_call.1} parent=39 // pred_check
          %p1257 = pneg %p147
        $region42: #{tpu_custom_call.1} parent=39 // pred_check_branch
          %1259 = sbr.rel (%p1257) target = $region44
        $region43: #{tpu_custom_call.1} parent=39 // pred_region
          %s1260 = smul.u32 16, %s19
          %s1262 = ssub.s32 2048, 2048
          %1263 = vsyncadd %s1253, %s1262
          %s1264 = smul.addr %s1260, 128
          %s1265 = scalar_lea.hbm %s5, %s1264
          %s1266 = sshll.u32 %s1256, 4
          %s1267 = int_to_ptr.vmem [resolvable:$true] %s1266
          %1272 = dma.vmem_to_hbm [thread:$0]  %s1267, 2048, %s1265, %s1253, 128, 128, 8
        $region44: #{tpu_custom_call.1} parent=39 // pred_fallthru
          _
      $region40: #{tpu_custom_call.1} parent=5 // pred_fallthru
        _
      %p1273 = scmp.le.s32.totalorder 2, %s14
      // Predicated region
      $region45: #{tpu_custom_call.1} parent=5 // pred_check
        %p1274 = pneg %p1273
      $region46: #{tpu_custom_call.1} parent=5 // pred_check_branch
        %1276 = sbr.rel (%p1274) target = $region48
      $region47: #{tpu_custom_call.1} parent=5 // pred_region
        %s1277 = ssub.s32 %s14, 2
        // Predicated region
        $region49: #{tpu_custom_call.1} parent=47 // pred_check
          %p1278 = pneg %p153
        $region50: #{tpu_custom_call.1} parent=47 // pred_check_branch
          %1280 = sbr.rel (%p1278) target = $region52
        $region51: #{tpu_custom_call.1} parent=47 // pred_region
          %s1281 = sand.u32 %s138, 1
          %s1282 = scalar_lea.sflag [#allocation3], %s1281
          %s1283 = sand.u32 %s138, 1
          %s1284 = smul.addr %s1283, 128
          %s1285 = scalar_lea.vmem [#allocation2], %s1284
          %1286 = dma.done %s1282, 2048
        $region52: #{tpu_custom_call.1} parent=47 // pred_fallthru
          _
      $region48: #{tpu_custom_call.1} parent=5 // pred_fallthru
        _
    $region6: #{tpu_custom_call.1} parent=1 // loop_footer
      %s18 = sadd.s32 1, %s14
    $region7: #{tpu_custom_call.1} parent=1 // loop_footer_branch
      %13 = sbr.rel target = $region3
    $region8: #{tpu_custom_call.1} parent=1 // loop_exit
      _
    %1287 = vsyncpa [#allocation3], 1
    %s1288 = scalar_lea.sflag [#allocation3], 1
    %1289 = vsyncpa %s1288, 1

</llo_original>
